<compile_context>
chip_gen: v5e
topology: v5e:2x2
jax: 0.10.0
libtpu: 0.0.40
codegen_flags: <defaults>
</compile_context>

<pallas_src>
import functools

import jax
import jax.numpy as jnp
from jax import lax
from jax.experimental import pallas as pl
from jax.experimental.pallas import tpu as pltpu

# Below this many elements, a Pallas custom-call launch costs more than it saves.
_MIN_PALLAS_ELEMS = 1 << 15


# ----------------------------------------------------------------------------- helpers
def _should_use_pallas(n_elems, use_pallas):
    if use_pallas is None:
        return n_elems >= _MIN_PALLAS_ELEMS
    return bool(use_pallas)


def _choose_tile_rows(n_rows, bytes_per_row, target_bytes=4 << 20, max_rows=None):
    """Largest batch-tile (multiple of 8) whose working set stays ~target_bytes.

    Conservative so that double-buffered in+out blocks stay well under the
    default scoped VMEM limit on all of v5e / v6e / v7x (64 MiB on v7x).
    """
    rows = target_bytes // max(int(bytes_per_row), 1)
    if max_rows is not None:
        rows = min(rows, max_rows)
    rows = max(1, rows)
    if rows >= n_rows:
        return n_rows
    return max(8, (rows // 8) * 8)


# ----------------------------------------------------------------------------- kernels
def _sample_eps_kernel(mu_ref, logvar_ref, eps_ref, out_ref):
    # out[b, s, :] = mu[b] + exp(0.5 * logvar[b]) * eps[b, s]
    mu = mu_ref[...].astype(jnp.float32)                      # (TB, D)
    std = jnp.exp(0.5 * logvar_ref[...].astype(jnp.float32))  # (TB, D) hoisted over n
    eps = eps_ref[...].astype(jnp.float32)                    # (TB, N, D)
    out = mu[:, None, :] + std[:, None, :] * eps              # (TB, N, D)
    out_ref[...] = out.astype(out_ref.dtype)


def _kl_kernel(mu_ref, logvar_ref, out_ref, *, batch, tile_b):
    # KL( N(mu, exp(logvar)) || N(0, I) ), summed over D, mean over batch.
    i = pl.program_id(0)

    @pl.when(i == 0)
    def _init():
        out_ref[...] = jnp.zeros_like(out_ref)

    mu = mu_ref[...].astype(jnp.float32)                      # (TB, D)
    logvar = logvar_ref[...].astype(jnp.float32)              # (TB, D)

    # Mask padded rows of a ragged final tile before any transcendental.
    row = lax.broadcasted_iota(jnp.int32, mu.shape, 0) + i * tile_b
    valid = row < batch
    mu = jnp.where(valid, mu, 0.0)
    logvar = jnp.where(valid, logvar, 0.0)

    kl_elem = 0.5 * (jnp.exp(logvar) + mu * mu - 1.0 - logvar)            # (TB, D)
    partial = jnp.sum(jnp.sum(kl_elem, axis=-1, keepdims=True), axis=0, keepdims=True)
    out_ref[...] += partial

    @pl.when(i == pl.num_programs(0) - 1)
    def _finalize():
        out_ref[...] = out_ref[...] / batch


# ----------------------------------------------------------------------------- wrappers
def _sample_ref(mu, logvar, eps, out_dtype):
    std = jnp.exp(0.5 * logvar.astype(jnp.float32))
    out = mu.astype(jnp.float32)[:, None, :] + std[:, None, :] * eps.astype(jnp.float32)
    return out.astype(out_dtype)


def _kl_ref(mu, logvar):
    mu = mu.astype(jnp.float32)
    lv = logvar.astype(jnp.float32)
    return jnp.mean(jnp.sum(0.5 * (jnp.exp(lv) + mu * mu - 1.0 - lv), axis=-1))


def pallas_sample_with_eps(mu, logvar, eps, *, use_pallas=None, max_tile_rows=None):
    """Reparameterized sampling with externally supplied noise eps of shape (B, n, D)."""
    B, D = mu.shape
    N = eps.shape[1]
    out_dtype = jnp.result_type(mu.dtype, logvar.dtype, eps.dtype)
    if not _should_use_pallas(B * N * D, use_pallas):
        return _sample_ref(mu, logvar, eps, out_dtype)

    bytes_per_row = (N * D * (eps.dtype.itemsize + jnp.dtype(out_dtype).itemsize)
                     + 2 * D * mu.dtype.itemsize)
    tile_b = _choose_tile_rows(B, bytes_per_row, max_rows=max_tile_rows)
    grid = (pl.cdiv(B, tile_b),)

    return pl.pallas_call(
        _sample_eps_kernel,
        out_shape=jax.ShapeDtypeStruct((B, N, D), out_dtype),
        grid=grid,
        in_specs=[
            pl.BlockSpec((tile_b, D), lambda i: (i, 0)),
            pl.BlockSpec((tile_b, D), lambda i: (i, 0)),
            pl.BlockSpec((tile_b, N, D), lambda i: (i, 0, 0)),
        ],
        out_specs=pl.BlockSpec((tile_b, N, D), lambda i: (i, 0, 0)),
        compiler_params=pltpu.CompilerParams(dimension_semantics=("parallel",)),
    )(mu, logvar, eps)


def pallas_sample_rng(mu, logvar, n, seed, *, use_pallas=None, max_tile_rows=None):
    """Reparameterized sampling; Gaussian noise generated with jax.random and the
    reparameterization fused in the Pallas eps-path kernel."""
    B, D = mu.shape
    eps = jax.random.normal(jax.random.PRNGKey(int(seed)), (B, n, D), jnp.float32)
    return pallas_sample_with_eps(mu, logvar, eps,
                                  use_pallas=use_pallas, max_tile_rows=max_tile_rows)


def pallas_kl_loss(mu_q, logvar_q, *, use_pallas=None, max_tile_rows=None):
    """KL divergence to the unit Gaussian prior, mean over the batch."""
    B, D = mu_q.shape
    if not _should_use_pallas(B * D, use_pallas):
        return _kl_ref(mu_q, logvar_q)

    bytes_per_row = 2 * D * 4
    tile_b = _choose_tile_rows(B, bytes_per_row, max_rows=max_tile_rows)
    grid = (pl.cdiv(B, tile_b),)
    kernel = functools.partial(_kl_kernel, batch=B, tile_b=tile_b)

    out = pl.pallas_call(
        kernel,
        out_shape=jax.ShapeDtypeStruct((1, 1), jnp.float32),
        grid=grid,
        in_specs=[
            pl.BlockSpec((tile_b, D), lambda i: (i, 0)),
            pl.BlockSpec((tile_b, D), lambda i: (i, 0)),
        ],
        out_specs=pl.BlockSpec((1, 1), lambda i: (0, 0)),
        compiler_params=pltpu.CompilerParams(dimension_semantics=("arbitrary",)),
    )(mu_q, logvar_q)
    return out[0, 0]


# ----------------------------------------------------------------------------- modules
class GaussianPrior:
    """Unit-Gaussian concrete semantics of the abstract tbsim `Prior` base class.

    The base class holds no learnable parameters (self._net = None).
    """

    def __init__(self, latent_dim, input_dim=None):
        self._latent_dim = latent_dim
        self._input_dim = input_dim

    @property
    def latent_dim(self):
        return self._latent_dim

    @property
    def posterior_param_shapes(self):
        return {"mu": (self._latent_dim,), "logvar": (self._latent_dim,)}

    def forward(self, inputs=None):
        batch = 1 if inputs is None else inputs.shape[0]
        mu = jnp.zeros((batch, self._latent_dim), jnp.float32)
        logvar = jnp.zeros((batch, self._latent_dim), jnp.float32)
        return {"mu": mu, "logvar": logvar}

    __call__ = forward

    @staticmethod
    def get_mean(prior_params):
        return prior_params["mu"]

    @staticmethod
    def sample_with_parameters(params, n, eps=None, seed=0,
                               use_pallas=None, max_tile_rows=None):
        mu, logvar = params["mu"], params["logvar"]
        if eps is not None:
            assert eps.shape == (mu.shape[0], n, mu.shape[1])
            return pallas_sample_with_eps(mu, logvar, eps,
                                          use_pallas=use_pallas,
                                          max_tile_rows=max_tile_rows)
        return pallas_sample_rng(mu, logvar, n, seed,
                                 use_pallas=use_pallas, max_tile_rows=max_tile_rows)

    def sample(self, n, inputs=None, eps=None, seed=0,
               use_pallas=None, max_tile_rows=None):
        params = self.forward(inputs=inputs)
        return self.sample_with_parameters(params, n=n, eps=eps, seed=seed,
                                           use_pallas=use_pallas,
                                           max_tile_rows=max_tile_rows)

    def kl_loss(self, posterior_params, inputs=None,
                use_pallas=None, max_tile_rows=None):
        return pallas_kl_loss(posterior_params["mu"], posterior_params["logvar"],
                              use_pallas=use_pallas, max_tile_rows=max_tile_rows)


class CVAE:
    """JAX equivalent of tbsim CVAE forward-pass plumbing.

    q_net / c_net / decoder are externally injected callables (as in PyTorch).
    """
    # TODO(synk): PerturbationGuidance / set_guidance / guidance-perturbed sampling
    #             (test-time gradient optimization machinery) has no Pallas
    #             equivalent here and is omitted.

    def __init__(self, q_net, c_net, decoder, prior):
        self.q_net = q_net
        self.c_net = c_net
        self.decoder = decoder
        self.prior = prior

    def forward(self, inputs, condition_inputs, decoder_kwargs=None, eps=None, seed=0):
        decoder_kwargs = {} if decoder_kwargs is None else decoder_kwargs
        c = self.c_net(condition_inputs)
        q_params = self.q_net(inputs=inputs, condition_features=c)
        z = self.prior.sample_with_parameters(q_params, n=1, eps=eps, seed=seed)[:, 0, :]
        x_out = self.decoder(latents=z, condition_features=c, **decoder_kwargs)
        return {"x_recons": x_out, "q_params": q_params, "z": z, "c": c}

    __call__ = forward

    def sample_z(self, condition_inputs, n, condition_feature=None, seed=0):
        c = condition_feature if condition_feature is not None else self.c_net(condition_inputs)
        z = self.prior.sample(n=n, inputs=c, seed=seed)
        return z, c

    def decode_z(self, z, cond_feat, decoder_kwargs=None):
        decoder_kwargs = {} if decoder_kwargs is None else decoder_kwargs
        B, n = z.shape[0], z.shape[1]
        z_flat = z.reshape(B * n, z.shape[-1])
        c_rep = jnp.repeat(cond_feat, n, axis=0)
        x = self.decoder(latents=z_flat, condition_features=c_rep, **decoder_kwargs)
        return x.reshape((B, n) + x.shape[1:])

    def sample(self, condition_inputs, n, condition_feature=None,
               decoder_kwargs=None, eps=None, seed=0):
        c = condition_feature if condition_feature is not None else self.c_net(condition_inputs)
        z = self.prior.sample(n=n, inputs=c, eps=eps, seed=seed)        # (B, n, D)
        return self.decode_z(z, c, decoder_kwargs=decoder_kwargs)

    def predict(self, condition_inputs, condition_feature=None, decoder_kwargs=None):
        decoder_kwargs = {} if decoder_kwargs is None else decoder_kwargs
        c = condition_feature if condition_feature is not None else self.c_net(condition_inputs)
        prior_params = self.prior(c)
        mu = self.prior.get_mean(prior_params)
        return self.decoder(latents=mu, condition_features=c, **decoder_kwargs)

    def compute_kl_loss(self, outputs):
        return self.prior.kl_loss(outputs["q_params"], inputs=outputs["c"])


# ----------------------------------------------------------------------------- main
if __name__ == "__main__":
    key = jax.random.PRNGKey(0)
    # Small shapes, but big enough to exercise a multi-tile grid (tile = 8 rows).
    batch, latent_dim, n_samples = 24, 128, 8
    cond_in_dim, cond_feat_dim, data_dim = 32, 16, 16
    max_tile_rows = 8     # force grid of 3 batch tiles for testing

    k1, k2, k3, k4, k5, k6 = jax.random.split(key, 6)
    mu_q = 0.1 * jax.random.normal(k1, (batch, latent_dim), jnp.float32)
    logvar_q = 0.1 * jax.random.normal(k2, (batch, latent_dim), jnp.float32)
    eps = jax.random.normal(k3, (batch, n_samples, latent_dim), jnp.float32)

    # --- 1) eps-path sample kernel (forced Pallas, tiled grid) ------------------
    samples = pallas_sample_with_eps(mu_q, logvar_q, eps,
                                     use_pallas=True, max_tile_rows=max_tile_rows)
    ref_samples = (mu_q[:, None, :]
                   + jnp.exp(0.5 * logvar_q)[:, None, :] * eps)

    # --- 2) KL kernel (forced Pallas, accumulator pattern) ----------------------
    kl = pallas_kl_loss(mu_q, logvar_q, use_pallas=True, max_tile_rows=max_tile_rows)
    ref_kl = jnp.mean(jnp.sum(0.5 * (jnp.exp(logvar_q) + mu_q**2 - 1.0 - logvar_q), axis=-1))

    # --- 3) prior sampling (unit-Gaussian prior, fused reparam kernel) ----------
    prior = GaussianPrior(latent_dim, input_dim=cond_in_dim)
    cond = jax.random.normal(k4, (batch, cond_in_dim), jnp.float32)
    z_rng = prior.sample(n_samples, inputs=cond, seed=1234,
                         use_pallas=True, max_tile_rows=max_tile_rows)

    # --- 4) tiny CVAE end-to-end (auto dispatch -> jnp fallback path) -----------
    # q_net / c_net / decoder are externally injected submodules in the PyTorch
    # CVAE; here they are simple example linear maps in plain JAX.
    kc, kq, kd = jax.random.split(k5, 3)
    wc = 0.1 * jax.random.normal(kc, (cond_in_dim, cond_feat_dim), jnp.float32)
    wq = 0.1 * jax.random.normal(kq, (data_dim + cond_feat_dim, 2 * latent_dim), jnp.float32)
    wd = 0.1 * jax.random.normal(kd, (latent_dim + cond_feat_dim, data_dim), jnp.float32)

    def c_net(condition_inputs):
        return condition_inputs @ wc

    def q_net(inputs, condition_features):
        h = jnp.concatenate([inputs, condition_features], axis=-1) @ wq
        mu, logvar = jnp.split(h, 2, axis=-1)
        return {"mu": mu, "logvar": logvar}

    def decoder(latents, condition_features):
        return jnp.concatenate([latents, condition_features], axis=-1) @ wd

    cvae = CVAE(q_net=q_net, c_net=c_net, decoder=decoder, prior=GaussianPrior(latent_dim))
    x_data = jax.random.normal(k6, (batch, data_dim), jnp.float32)
    eps_post = jax.random.normal(jax.random.PRNGKey(7), (batch, 1, latent_dim), jnp.float32)
    out = cvae.forward(inputs=x_data, condition_inputs=cond, eps=eps_post)
    kl_cvae = cvae.compute_kl_loss(out)
    x_samples = cvae.sample(condition_inputs=cond, n=4, seed=3)
    x_pred = cvae.predict(condition_inputs=cond)

    jax.block_until_ready((samples, kl, z_rng, out, kl_cvae, x_samples, x_pred))

    # --- checks -----------------------------------------------------------------
    assert samples.shape == (batch, n_samples, latent_dim)
    assert jnp.allclose(samples, ref_samples, atol=1e-5, rtol=1e-5)
    assert jnp.allclose(kl, ref_kl, atol=1e-4, rtol=1e-4)

    assert z_rng.shape == (batch, n_samples, latent_dim)
    assert bool(jnp.all(jnp.isfinite(z_rng)))
    assert abs(float(jnp.mean(z_rng))) < 0.05
    assert abs(float(jnp.std(z_rng)) - 1.0) < 0.05

    assert out["x_recons"].shape == (batch, data_dim)
    assert out["z"].shape == (batch, latent_dim)
    assert x_samples.shape == (batch, 4, data_dim)
    assert x_pred.shape == (batch, data_dim)
    assert bool(jnp.isfinite(kl_cvae))

    print("KERNEL_OK")
</pallas_src>

<mosaic_0001>
module attributes {stable_mosaic.version = 11 : i64} {
  func.func @_sample_eps_kernel(%arg0: i32, %arg1: memref<8x128xf32, #tpu.memory_space<vmem>>, %arg2: memref<8x128xf32, #tpu.memory_space<vmem>>, %arg3: memref<8x8x128xf32, #tpu.memory_space<vmem>>, %arg4: memref<8x8x128xf32, #tpu.memory_space<vmem>>) attributes {dimension_semantics = [#tpu.dimension_semantics<parallel>], iteration_bounds = array<i64: 3>, scalar_prefetch = 0 : i64, scratch_operands = 0 : i64, tpu.core_type = #tpu.core_type<tc>, window_params = [{transform_indices = @transform_0, window_bounds = array<i64: 8, 128>}, {transform_indices = @transform_1, window_bounds = array<i64: 8, 128>}, {transform_indices = @transform_2, window_bounds = array<i64: 8, 8, 128>}, {transform_indices = @transform_3, window_bounds = array<i64: 8, 8, 128>}]} {
    %c0 = arith.constant 0 : index
    %c0_0 = arith.constant 0 : index
    %0 = vector.load %arg1[%c0, %c0_0] : memref<8x128xf32, #tpu.memory_space<vmem>>, vector<8x128xf32>
    %c0_1 = arith.constant 0 : index
    %c0_2 = arith.constant 0 : index
    %1 = vector.load %arg2[%c0_1, %c0_2] : memref<8x128xf32, #tpu.memory_space<vmem>>, vector<8x128xf32>
    %cst = arith.constant 5.000000e-01 : f32
    %2 = vector.broadcast %cst : f32 to vector<8x128xf32>
    %3 = arith.mulf %2, %1 : vector<8x128xf32>
    %4 = math.exp %3 : vector<8x128xf32>
    %c0_3 = arith.constant 0 : index
    %c0_4 = arith.constant 0 : index
    %c0_5 = arith.constant 0 : index
    %5 = vector.load %arg3[%c0_3, %c0_4, %c0_5] : memref<8x8x128xf32, #tpu.memory_space<vmem>>, vector<8x8x128xf32>
    %6 = vector.shape_cast %0 : vector<8x128xf32> to vector<8x1x128xf32>
    %7 = vector.shape_cast %4 : vector<8x128xf32> to vector<8x1x128xf32>
    %8 = vector.broadcast %7 : vector<8x1x128xf32> to vector<8x8x128xf32>
    %9 = arith.mulf %8, %5 : vector<8x8x128xf32>
    %10 = vector.broadcast %6 : vector<8x1x128xf32> to vector<8x8x128xf32>
    %11 = arith.addf %10, %9 : vector<8x8x128xf32>
    %c0_6 = arith.constant 0 : index
    %c0_7 = arith.constant 0 : index
    %c0_8 = arith.constant 0 : index
    %12 = vector.load %arg4[%c0_6, %c0_7, %c0_8] : memref<8x8x128xf32, #tpu.memory_space<vmem>>, vector<8x8x128xf32>
    tpu.vector_store %arg4[%c0_6, %c0_7, %c0_8], %11 {strides = array<i32>} : memref<8x8x128xf32, #tpu.memory_space<vmem>>, vector<8x8x128xf32>,
    return
  }
  func.func @transform_0(%arg0: i32) -> (i32, i32) {
    %c0_i32 = arith.constant 0 : i32
    %c0_i32_0 = arith.constant 0 : i32
    return %arg0, %c0_i32 : i32, i32
  }
  func.func @transform_1(%arg0: i32) -> (i32, i32) {
    %c0_i32 = arith.constant 0 : i32
    %c0_i32_0 = arith.constant 0 : i32
    return %arg0, %c0_i32 : i32, i32
  }
  func.func @transform_2(%arg0: i32) -> (i32, i32, i32) {
    %c0_i32 = arith.constant 0 : i32
    %c0_i32_0 = arith.constant 0 : i32
    %c0_i32_1 = arith.constant 0 : i32
    return %arg0, %c0_i32, %c0_i32_0 : i32, i32, i32
  }
  func.func @transform_3(%arg0: i32) -> (i32, i32, i32) {
    %c0_i32 = arith.constant 0 : i32
    %c0_i32_0 = arith.constant 0 : i32
    %c0_i32_1 = arith.constant 0 : i32
    return %arg0, %c0_i32, %c0_i32_0 : i32, i32, i32
  }
}

</mosaic_0001>

<llo_original>
// kernel: tpu_custom_call.1
$region0: #{tpu_custom_call.1}
  #allocation0 [shape = 'u32[]', space=smem, size = 0x4, offset = 0x4, fixed_abs, tag = 'smem constant byte address 0x4 - core index']
  #allocation1 [shape = 'u32[72,128]{1,0:T(1,128)}', space=vmem, size = 0x9000, scoped, tag = 'internal scratch']
  %s0 = inlined_call_operand.hbm [shape: f32[24,128], index: 0, kind: input, shape index: {}]
  %s1 = inlined_call_operand.hbm [shape: f32[24,128], index: 1, kind: input, shape index: {}]
  %s2 = inlined_call_operand.hbm [shape: f32[24,8,128], index: 2, kind: input, shape index: {}]
  %s3 = inlined_call_operand.hbm [shape: f32[24,8,128], index: 3, kind: output, shape index: {}]
  %s4 = sld [smem:[#allocation0]]
  $region57: #{tpu_custom_call.1} parent=0
    _
  %s6 = ssub.s32 1, %s4
  %s7 = scalar_select 0, %s6, %s4
  $region1: #{tpu_custom_call.1} parent=0
    #allocation2 [shape = 'u8[8192]{0}', space=vmem, size = 0x2000, scoped, tag = 'input window, operand 0']
    #allocation3 [shape = 's32[2]{0}', space=sflag, size = 0x8, scoped, tag = 'scoped memory for tpu_custom_call.1']
    #allocation4 [shape = 's32[2]{0}', space=sflag, size = 0x8, scoped, tag = 'scoped memory for tpu_custom_call.1']
    #allocation5 [shape = 'u8[8192]{0}', space=vmem, size = 0x2000, scoped, tag = 'input window, operand 1']
    #allocation6 [shape = 's32[2]{0}', space=sflag, size = 0x8, scoped, tag = 'scoped memory for tpu_custom_call.1']
    #allocation7 [shape = 'u8[65536]{0}', space=vmem, size = 0x10000, scoped, tag = 'input window, operand 2']
    #allocation8 [shape = 'u8[65536]{0}', space=vmem, size = 0x10000, scoped, tag = 'output window, operand 0']
    %8 = vsyncpa [#allocation3], 0
    %s9 = scalar_lea.sflag [#allocation3], 1
    %10 = vsyncpa %s9, 0
    %11 = vsyncpa [#allocation6], 0
    %s12 = scalar_lea.sflag [#allocation6], 1
    %13 = vsyncpa %s12, 0
    %14 = vsyncpa [#allocation4], 0
    %s15 = scalar_lea.sflag [#allocation4], 1
    %16 = vsyncpa %s15, 0
    loop: start=0, step=1, limit=5
    $region2: #{tpu_custom_call.1} parent=1 // loop_pre_header
      _
    $region3: #{tpu_custom_call.1} parent=1 // loop_header
      %s18 = sphi 0, %s22
      %p19 = scmp.ge.s32.totalorder %s18, 5
      %s28 = sphi 0, %s30
      %s31 = sphi 0, %s28
      %s32 = sphi 0, %s31
      %s48 = sphi 0, %s32
      %s54 = sphi 0, %s56
      %s57 = sphi 0, %s54
      %s58 = sphi 0, %s57
      %s74 = sphi 0, %s58
      %s80 = sphi 0, %s82
      %s83 = sphi 0, %s80
      %s84 = sphi 0, %s83
      %s100 = sphi 0, %s84
      %s106 = sphi 0, %s108
      %s109 = sphi 0, %s106
      %s110 = sphi 0, %s109
      %s126 = sphi 0, %s110
    $region4: #{tpu_custom_call.1} parent=1 // loop_header_branch
      %21 = sbr.rel (%p19) target = $region8
    $region5: #{tpu_custom_call.1} parent=1 // loop_body
      %s23 = ssub.s32 %s18, 1
      %s24 = ssub.s32 %s18, 2
      %s25 = sadd.s32 %s18, 1
      %s26 = ssub.s32 %s18, %s25
      %p27 = scmp.eq.s32.totalorder %s26, 0
      %s29 = sadd.s32 %s28, 1
      %s30 = scalar_select %p27, %s28, %s29
      %p33 = pneg %p27
      %p34 = scmp.eq.s32.totalorder %s18, 2
      %p35 = por %p33, %p34
      %p36 = scmp.ne.s32.totalorder %s28, %s31
      %p37 = scmp.eq.s32.totalorder %s18, 0
      %p38 = por %p36, %p37
      %p39 = scmp.ne.s32.totalorder %s28, %s31
      %p40 = scmp.eq.s32.totalorder %s23, 2
      %p41 = por %p39, %p40
      %p42 = scmp.ne.s32.totalorder %s31, %s32
      %p43 = scmp.eq.s32.totalorder %s23, 0
      %p44 = por %p42, %p43
      %p45 = scmp.ne.s32.totalorder %s31, %s32
      %p46 = scmp.eq.s32.totalorder %s24, 2
      %p47 = por %p45, %p46
      %p49 = scmp.ne.s32.totalorder %s32, %s48
      %p50 = scmp.eq.s32.totalorder %s24, 0
      %p51 = por %p49, %p50
      %s52 = ssub.s32 %s18, %s25
      %p53 = scmp.eq.s32.totalorder %s52, 0
      %s55 = sadd.s32 %s54, 1
      %s56 = scalar_select %p53, %s54, %s55
      %p59 = pneg %p53
      %p60 = scmp.eq.s32.totalorder %s18, 2
      %p61 = por %p59, %p60
      %p62 = scmp.ne.s32.totalorder %s54, %s57
      %p63 = scmp.eq.s32.totalorder %s18, 0
      %p64 = por %p62, %p63
      %p65 = scmp.ne.s32.totalorder %s54, %s57
      %p66 = scmp.eq.s32.totalorder %s23, 2
      %p67 = por %p65, %p66
      %p68 = scmp.ne.s32.totalorder %s57, %s58
      %p69 = scmp.eq.s32.totalorder %s23, 0
      %p70 = por %p68, %p69
      %p71 = scmp.ne.s32.totalorder %s57, %s58
      %p72 = scmp.eq.s32.totalorder %s24, 2
      %p73 = por %p71, %p72
      %p75 = scmp.ne.s32.totalorder %s58, %s74
      %p76 = scmp.eq.s32.totalorder %s24, 0
      %p77 = por %p75, %p76
      %s78 = ssub.s32 %s18, %s25
      %p79 = scmp.eq.s32.totalorder %s78, 0
      %s81 = sadd.s32 %s80, 1
      %s82 = scalar_select %p79, %s80, %s81
      %p85 = pneg %p79
      %p86 = scmp.eq.s32.totalorder %s18, 2
      %p87 = por %p85, %p86
      %p88 = scmp.ne.s32.totalorder %s80, %s83
      %p89 = scmp.eq.s32.totalorder %s18, 0
      %p90 = por %p88, %p89
      %p91 = scmp.ne.s32.totalorder %s80, %s83
      %p92 = scmp.eq.s32.totalorder %s23, 2
      %p93 = por %p91, %p92
      %p94 = scmp.ne.s32.totalorder %s83, %s84
      %p95 = scmp.eq.s32.totalorder %s23, 0
      %p96 = por %p94, %p95
      %p97 = scmp.ne.s32.totalorder %s83, %s84
      %p98 = scmp.eq.s32.totalorder %s24, 2
      %p99 = por %p97, %p98
      %p101 = scmp.ne.s32.totalorder %s84, %s100
      %p102 = scmp.eq.s32.totalorder %s24, 0
      %p103 = por %p101, %p102
      %s104 = ssub.s32 %s18, %s25
      %p105 = scmp.eq.s32.totalorder %s104, 0
      %s107 = sadd.s32 %s106, 1
      %s108 = scalar_select %p105, %s106, %s107
      %p111 = pneg %p105
      %p112 = scmp.eq.s32.totalorder %s18, 2
      %p113 = por %p111, %p112
      %p114 = scmp.ne.s32.totalorder %s106, %s109
      %p115 = scmp.eq.s32.totalorder %s18, 0
      %p116 = por %p114, %p115
      %p117 = scmp.ne.s32.totalorder %s106, %s109
      %p118 = scmp.eq.s32.totalorder %s23, 2
      %p119 = por %p117, %p118
      %p120 = scmp.ne.s32.totalorder %s109, %s110
      %p121 = scmp.eq.s32.totalorder %s23, 0
      %p122 = por %p120, %p121
      %p123 = scmp.ne.s32.totalorder %s109, %s110
      %p124 = scmp.eq.s32.totalorder %s24, 2
      %p125 = por %p123, %p124
      %p127 = scmp.ne.s32.totalorder %s110, %s126
      %p128 = scmp.eq.s32.totalorder %s24, 0
      %p129 = por %p127, %p128
      %p130 = scmp.le.s32.totalorder 1, %s18
      %p131 = scmp.lt.s32.totalorder %s18, 4
      %p132 = pnand %p130, %p131
      %p133 = pneg %p132
      // Predicated region
      $region9: #{tpu_custom_call.1} parent=5 // pred_check
        _
      $region10: #{tpu_custom_call.1} parent=5 // pred_check_branch
        %135 = sbr.rel (%p132) target = $region12
      $region11: #{tpu_custom_call.1} parent=5 // pred_region
        %s136 = ssub.s32 %s18, 1
      $region12: #{tpu_custom_call.1} parent=5 // pred_fallthru
        _
      %p137 = scmp.lt.s32.totalorder %s18, 3
      // Predicated region
      $region13: #{tpu_custom_call.1} parent=5 // pred_check
        %p138 = pneg %p137
      $region14: #{tpu_custom_call.1} parent=5 // pred_check_branch
        %140 = sbr.rel (%p138) target = $region16
      $region15: #{tpu_custom_call.1} parent=5 // pred_region
        // Predicated region
        $region17: #{tpu_custom_call.1} parent=15 // pred_check
          %p141 = pneg %p38
        $region18: #{tpu_custom_call.1} parent=15 // pred_check_branch
          %143 = sbr.rel (%p141) target = $region20
        $region19: #{tpu_custom_call.1} parent=15 // pred_region
          %s144 = sand.u32 %s28, 1
          %s145 = scalar_lea.sflag [#allocation3], %s144
          %s146 = sand.u32 %s28, 1
          %s147 = smul.addr %s146, 8
          %s148 = scalar_lea.vmem [#allocation2], %s147
          %150 = vsyncadd %s145, 0
          %s151 = smul.addr %s18, 8
          %s152 = scalar_lea.hbm %s0, %s151
          %s154 = sshll.u32 %s152, 4
          %s155 = int_to_ptr.hbm [resolvable:$true] %s154
          %s156 = sshll.u32 %s148, 4
          %s157 = int_to_ptr.vmem [resolvable:$true] %s156
          %159 = dma.hbm_to_vmem [thread:$0]  %s155, 128, %s157, %s145
        $region20: #{tpu_custom_call.1} parent=15 // pred_fallthru
          _
        // Predicated region
        $region21: #{tpu_custom_call.1} parent=15 // pred_check
          %p160 = pneg %p64
        $region22: #{tpu_custom_call.1} parent=15 // pred_check_branch
          %162 = sbr.rel (%p160) target = $region24
        $region23: #{tpu_custom_call.1} parent=15 // pred_region
          %s163 = sand.u32 %s18, 1
          %s164 = scalar_lea.sflag [#allocation6], %s163
          %s165 = sand.u32 %s54, 1
          %s166 = smul.addr %s165, 8
          %s167 = scalar_lea.vmem [#allocation5], %s166
          %169 = vsyncadd %s164, 0
          %s170 = smul.addr %s18, 8
          %s171 = scalar_lea.hbm %s1, %s170
          %s173 = sshll.u32 %s171, 4
          %s174 = int_to_ptr.hbm [resolvable:$true] %s173
          %s175 = sshll.u32 %s167, 4
          %s176 = int_to_ptr.vmem [resolvable:$true] %s175
          %178 = dma.hbm_to_vmem [thread:$0]  %s174, 128, %s176, %s164
        $region24: #{tpu_custom_call.1} parent=15 // pred_fallthru
          _
        // Predicated region
        $region25: #{tpu_custom_call.1} parent=15 // pred_check
          %p179 = pneg %p90
        $region26: #{tpu_custom_call.1} parent=15 // pred_check_branch
          %181 = sbr.rel (%p179) target = $region28
        $region27: #{tpu_custom_call.1} parent=15 // pred_region
          %s182 = sand.u32 %s18, 1
          %s183 = scalar_lea.sflag [#allocation6], %s182
          %s184 = sand.u32 %s80, 1
          %s185 = smul.addr %s184, 64
          %s186 = scalar_lea.vmem [#allocation7], %s185
          %s187 = smul.u32 8, %s18
          %189 = vsyncadd %s183, 0
          %s190 = smul.addr %s187, 8
          %s191 = scalar_lea.hbm %s2, %s190
          %s192 = sshll.u32 %s191, 4
          %s193 = int_to_ptr.hbm [resolvable:$true] %s192
          %s194 = sshll.u32 %s186, 4
          %s195 = int_to_ptr.vmem [resolvable:$true] %s194
          %200 = dma.hbm_to_vmem [thread:$0]  %s193, 1024, %s195, %s183, 128, 128, 8
        $region28: #{tpu_custom_call.1} parent=15 // pred_fallthru
          _
      $region16: #{tpu_custom_call.1} parent=5 // pred_fallthru
        _
      %p201 = scmp.le.s32.totalorder 1, %s18
      %p202 = scmp.lt.s32.totalorder %s18, 4
      %p203 = pnand %p201, %p202
      %p204 = pneg %p203
      // Predicated region
      $region29: #{tpu_custom_call.1} parent=5 // pred_check
        _
      $region30: #{tpu_custom_call.1} parent=5 // pred_check_branch
        %206 = sbr.rel (%p203) target = $region32
      $region31: #{tpu_custom_call.1} parent=5 // pred_region
        %s207 = ssub.s32 %s18, 1
        %s208 = sand.u32 %s31, 1
        %s209 = scalar_lea.sflag [#allocation3], %s208
        %s210 = sand.u32 %s31, 1
        %s211 = smul.addr %s210, 8
        %s212 = scalar_lea.vmem [#allocation2], %s211
        // Predicated region
        $region33: #{tpu_custom_call.1} parent=31 // pred_check
          %p213 = pneg %p44
        $region34: #{tpu_custom_call.1} parent=31 // pred_check_branch
          %215 = sbr.rel (%p213) target = $region36
        $region35: #{tpu_custom_call.1} parent=31 // pred_region
          %217 = dma.done %s209, 128
        $region36: #{tpu_custom_call.1} parent=31 // pred_fallthru
          _
        %s218 = sand.u32 %s23, 1
        %s219 = scalar_lea.sflag [#allocation6], %s218
        %s220 = sand.u32 %s57, 1
        %s221 = smul.addr %s220, 8
        %s222 = scalar_lea.vmem [#allocation5], %s221
        // Predicated region
        $region37: #{tpu_custom_call.1} parent=31 // pred_check
          %p223 = pneg %p70
        $region38: #{tpu_custom_call.1} parent=31 // pred_check_branch
          %225 = sbr.rel (%p223) target = $region40
        $region39: #{tpu_custom_call.1} parent=31 // pred_region
          %227 = dma.done %s219, 128
        $region40: #{tpu_custom_call.1} parent=31 // pred_fallthru
          _
        %s228 = sand.u32 %s23, 1
        %s229 = scalar_lea.sflag [#allocation6], %s228
        %s230 = sand.u32 %s83, 1
        %s231 = smul.addr %s230, 64
        %s232 = scalar_lea.vmem [#allocation7], %s231
        // Predicated region
        $region41: #{tpu_custom_call.1} parent=31 // pred_check
          %p233 = pneg %p96
        $region42: #{tpu_custom_call.1} parent=31 // pred_check_branch
          %235 = sbr.rel (%p233) target = $region44
        $region43: #{tpu_custom_call.1} parent=31 // pred_region
          %237 = dma.done %s229, 1024
        $region44: #{tpu_custom_call.1} parent=31 // pred_fallthru
          _
        %s238 = sand.u32 %s31, 1
        %s239 = scalar_lea.sflag [#allocation3], %s238
        %s240 = sand.u32 %s31, 1
        %s241 = smul.addr %s240, 8
        %s242 = scalar_lea.vmem [#allocation2], %s241
        %p243 = pneg %p44
        %p244 = pneg %p41
        %s245 = sand.u32 %s23, 1
        %s246 = scalar_lea.sflag [#allocation6], %s245
        %s247 = sand.u32 %s57, 1
        %s248 = smul.addr %s247, 8
        %s249 = scalar_lea.vmem [#allocation5], %s248
        %p250 = pneg %p70
        %p251 = pneg %p67
        %s252 = sand.u32 %s23, 1
        %s253 = scalar_lea.sflag [#allocation6], %s252
        %s254 = sand.u32 %s83, 1
        %s255 = smul.addr %s254, 64
        %s256 = scalar_lea.vmem [#allocation7], %s255
        %p257 = pneg %p96
        %p258 = pneg %p93
        %p259 = pneg %p122
        %p260 = pneg %p119
        %s261 = sand.u32 %s109, 1
        %s262 = scalar_lea.sflag [#allocation4], %s261
        %s263 = sand.u32 %s109, 1
        %s264 = smul.addr %s263, 64
        %s265 = scalar_lea.vmem [#allocation8], %s264
        %s266 = smul.u32 8, %s23
        %s267 = smul.u32 8, %s23
        %v268 = vld [vmem:[%s212] sm:$0xff]
        %v269 = vld [vmem:[%s222] sm:$0xff]
        %v270 = vmul.f32 %v269, 0.5
        %v271 = vmul.f32 %v270, 1.442695
        %v272 = vpow.pop %v271
        %v273 = vld [vmem:[%s232] sm:$0xff]
        %v274 = vld [vmem:[%s232 + $0x8] sm:$0xff]
        %v275 = vld [vmem:[%s232 + $0x10] sm:$0xff]
        %v276 = vld [vmem:[%s232 + $0x18] sm:$0xff]
        %v277 = vld [vmem:[%s232 + $0x20] sm:$0xff]
        %v278 = vld [vmem:[%s232 + $0x28] sm:$0xff]
        %v279 = vld [vmem:[%s232 + $0x30] sm:$0xff]
        %v280 = vld [vmem:[%s232 + $0x38] sm:$0xff]
        %v282 = vrot.slane %v268, 1
        %v283 = vrot.slane %v268, 2
        %v284 = vrot.slane %v268, 3
        %v285 = vrot.slane %v268, 4
        %v286 = vrot.slane %v268, 5
        %v287 = vrot.slane %v268, 6
        %v288 = vrot.slane %v268, 7
        %v290 = vrot.slane %v272, 1
        %v291 = vrot.slane %v272, 2
        %v292 = vrot.slane %v272, 3
        %v293 = vrot.slane %v272, 4
        %v294 = vrot.slane %v272, 5
        %v295 = vrot.slane %v272, 6
        %v296 = vrot.slane %v272, 7
        %v297 = vperm.slane %v272, 0
        %v298 = vperm.slane %v290, 0
        %v299 = vperm.slane %v291, 0
        %v300 = vperm.slane %v292, 0
        %v301 = vperm.slane %v293, 0
        %v302 = vperm.slane %v294, 0
        %v303 = vperm.slane %v295, 0
        %v304 = vperm.slane %v296, 0
        %v313 = vmul.f32 %v297, %v273
        %v314 = vmul.f32 %v298, %v274
        %v315 = vmul.f32 %v299, %v275
        %v316 = vmul.f32 %v300, %v276
        %v317 = vmul.f32 %v301, %v277
        %v318 = vmul.f32 %v302, %v278
        %v319 = vmul.f32 %v303, %v279
        %v320 = vmul.f32 %v304, %v280
        %v321 = vperm.slane %v268, 0
        %v322 = vperm.slane %v282, 0
        %v323 = vperm.slane %v283, 0
        %v324 = vperm.slane %v284, 0
        %v325 = vperm.slane %v285, 0
        %v326 = vperm.slane %v286, 0
        %v327 = vperm.slane %v287, 0
        %v328 = vperm.slane %v288, 0
        %v337 = vadd.f32 %v321, %v313
        %v338 = vadd.f32 %v322, %v314
        %v339 = vadd.f32 %v323, %v315
        %v340 = vadd.f32 %v324, %v316
        %v341 = vadd.f32 %v325, %v317
        %v342 = vadd.f32 %v326, %v318
        %v343 = vadd.f32 %v327, %v319
        %v344 = vadd.f32 %v328, %v320
        %345 = vst [vmem:[%s265] sm:$0xff] %v337
        %346 = vst [vmem:[%s265 + $0x8] sm:$0xff] %v338
        %347 = vst [vmem:[%s265 + $0x10] sm:$0xff] %v339
        %348 = vst [vmem:[%s265 + $0x18] sm:$0xff] %v340
        %349 = vst [vmem:[%s265 + $0x20] sm:$0xff] %v341
        %350 = vst [vmem:[%s265 + $0x28] sm:$0xff] %v342
        %351 = vst [vmem:[%s265 + $0x30] sm:$0xff] %v343
        %352 = vst [vmem:[%s265 + $0x38] sm:$0xff] %v344
        %s353 = sand.u32 %s109, 1
        %s354 = scalar_lea.sflag [#allocation4], %s353
        %s355 = sand.u32 %s109, 1
        %s356 = smul.addr %s355, 64
        %s357 = scalar_lea.vmem [#allocation8], %s356
        // Predicated region
        $region45: #{tpu_custom_call.1} parent=31 // pred_check
          %p358 = pneg %p119
        $region46: #{tpu_custom_call.1} parent=31 // pred_check_branch
          %360 = sbr.rel (%p358) target = $region48
        $region47: #{tpu_custom_call.1} parent=31 // pred_region
          %s361 = smul.u32 8, %s23
          %363 = vsyncadd %s354, 0
          %s364 = smul.addr %s361, 8
          %s365 = scalar_lea.hbm %s3, %s364
          %s366 = sshll.u32 %s357, 4
          %s367 = int_to_ptr.vmem [resolvable:$true] %s366
          %s368 = sshll.u32 %s365, 4
          %s369 = int_to_ptr.hbm [resolvable:$true] %s368
          %374 = dma.vmem_to_hbm [thread:$0]  %s367, 1024, %s369, %s354, 128, 128, 8
        $region48: #{tpu_custom_call.1} parent=31 // pred_fallthru
          _
      $region32: #{tpu_custom_call.1} parent=5 // pred_fallthru
        _
      %p375 = scmp.le.s32.totalorder 2, %s18
      // Predicated region
      $region49: #{tpu_custom_call.1} parent=5 // pred_check
        %p376 = pneg %p375
      $region50: #{tpu_custom_call.1} parent=5 // pred_check_branch
        %378 = sbr.rel (%p376) target = $region52
      $region51: #{tpu_custom_call.1} parent=5 // pred_region
        %s379 = ssub.s32 %s18, 2
        // Predicated region
        $region53: #{tpu_custom_call.1} parent=51 // pred_check
          %p380 = pneg %p125
        $region54: #{tpu_custom_call.1} parent=51 // pred_check_branch
          %382 = sbr.rel (%p380) target = $region56
        $region55: #{tpu_custom_call.1} parent=51 // pred_region
          %s383 = sand.u32 %s110, 1
          %s384 = scalar_lea.sflag [#allocation4], %s383
          %s385 = sand.u32 %s110, 1
          %s386 = smul.addr %s385, 64
          %s387 = scalar_lea.vmem [#allocation8], %s386
          %389 = dma.done %s384, 1024
        $region56: #{tpu_custom_call.1} parent=51 // pred_fallthru
          _
      $region52: #{tpu_custom_call.1} parent=5 // pred_fallthru
        _
    $region6: #{tpu_custom_call.1} parent=1 // loop_footer
      %s22 = sadd.s32 1, %s18
    $region7: #{tpu_custom_call.1} parent=1 // loop_footer_branch
      %17 = sbr.rel target = $region3
    $region8: #{tpu_custom_call.1} parent=1 // loop_exit
      _
    %390 = vsyncpa [#allocation3], 1
    %s391 = scalar_lea.sflag [#allocation3], 1
    %392 = vsyncpa %s391, 1
    %393 = vsyncpa [#allocation6], 1
    %s394 = scalar_lea.sflag [#allocation6], 1
    %395 = vsyncpa %s394, 1
    %396 = vsyncpa [#allocation4], 1
    %s397 = scalar_lea.sflag [#allocation4], 1
    %398 = vsyncpa %s397, 1

</llo_original>
